<compile_context>
chip_gen: v5e
topology: v5e:2x2
jax: 0.10.0
libtpu: 0.0.40
codegen_flags: <defaults>
</compile_context>

<pallas_src>
import functools

import numpy as np
import jax
import jax.numpy as jnp
from jax.experimental import pallas as pl
from jax.experimental.pallas import tpu as pltpu

LANE = 128   # lane width (last dim tiling)
SUB = 8      # sublane width (second-to-last dim tiling, f32)


def _round_up(x: int, m: int) -> int:
    return (x + m - 1) // m * m


def _vmem_cap_bytes() -> int:
    """Physical per-core VMEM with ~20% headroom left for compiler scratch / spills.
    v5e/v6e (128 MiB) -> ~102 MiB usable; v7x (64 MiB) -> ~51 MiB usable."""
    phys = None
    try:
        phys = getattr(pltpu.get_tpu_info(), "vmem_capacity_bytes", None)
    except Exception:
        phys = None
    if not phys:
        phys = 64 << 20  # conservative: assume v7x (smallest per-TC VMEM)
    return int(phys * 0.8)


def _resident_spec(block_shape, index_map):
    """BlockSpec for an operand whose block index never changes: single-buffer it
    (halves its VMEM footprint). Falls back to the default double-buffered spec on
    jax versions without pipeline_mode support."""
    if hasattr(pl, "Buffered"):
        try:
            return pl.BlockSpec(block_shape, index_map, pipeline_mode=pl.Buffered(1))
        except TypeError:
            pass
    return pl.BlockSpec(block_shape, index_map)


def _pad2(a, rows: int, cols: int, *, fill=0.0, dtype=None):
    """Pad a 2-D array up to (rows, cols); no-op (no HBM pass) when already aligned."""
    dtype = np.dtype(dtype if dtype is not None else a.dtype)
    if a.shape == (rows, cols) and a.dtype == dtype:
        return a
    out = jnp.full((rows, cols), fill, dtype=dtype)
    return out.at[: a.shape[0], : a.shape[1]].set(a.astype(dtype))


# ----------------------------------------------------------------------------- kernels
def mlp_softmax_kernel(x_ref, w_ref, b_ref, o_ref):
    """Resident-weight path: one batch tile per grid step."""
    # MXU matmul in the operands' native dtype, f32 accumulation; bias add fused.
    # Bias pad lanes hold -1e30 so padded output columns vanish from the softmax.
    o_ref[...] = (
        jnp.dot(x_ref[...], w_ref[...], preferred_element_type=jnp.float32)
        + b_ref[...]
    )
    # In-place numerically stable row softmax (single live (tb, d_out) f32 buffer).
    logits = o_ref[...]
    e = jnp.exp(logits - jnp.max(logits, axis=-1, keepdims=True))
    o_ref[...] = e * pl.reciprocal(jnp.sum(e, axis=-1, keepdims=True))


def mlp_softmax_ktiled_kernel(x_ref, w_ref, b_ref, o_ref, acc_ref):
    """Streamed-weight (K-tiled) path: f32 accumulator, softmax finalized at last K step."""
    k = pl.program_id(1)

    @pl.when(k == 0)
    def _init():
        acc_ref[...] = jnp.zeros_like(acc_ref)

    acc_ref[...] += jnp.dot(x_ref[...], w_ref[...], preferred_element_type=jnp.float32)

    @pl.when(k == pl.num_programs(1) - 1)
    def _finalize():
        logits = acc_ref[...] + b_ref[...]
        e = jnp.exp(logits - jnp.max(logits, axis=-1, keepdims=True))
        o_ref[...] = e * pl.reciprocal(jnp.sum(e, axis=-1, keepdims=True))


# ----------------------------------------------------------------------------- wrappers
def _run_resident(x, weight, bias, B, D_in, D_out, d_in_p, d_out_p,
                  compute_dtype, in_itemsize, vmem_cap, min_grid_steps):
    # Batch tile sized from a streamed-byte budget (~4 MiB of x per tile), then
    # shrunk until the full VMEM footprint fits with headroom.
    tb_target = max(SUB, min(2048, (4 << 20) // max(1, d_in_p * in_itemsize)))
    tb = min(_round_up(tb_target, SUB), _round_up(B, SUB))
    if min_grid_steps > 1 and B > SUB:
        # Keep >= min_grid_steps grid steps so the "parallel" axis feeds both v7x TCs.
        tb = min(tb, _round_up(pl.cdiv(B, min_grid_steps), SUB))

    def footprint(t):
        return (2 * t * d_in_p * in_itemsize        # double-buffered streamed x tiles
                + 2 * t * d_out_p * 4               # double-buffered f32 output tiles
                + d_in_p * d_out_p * in_itemsize    # resident weight (Buffered(1))
                + d_out_p * 4                       # resident bias
                + 2 * t * d_out_p * 4)              # exp/softmax f32 temporaries

    while tb > SUB and footprint(tb) > vmem_cap:
        tb -= SUB
    b_p = _round_up(B, tb)
    grid = (b_p // tb,)

    xp = _pad2(x, b_p, d_in_p, dtype=compute_dtype)
    wp = _pad2(weight, d_in_p, d_out_p, dtype=compute_dtype)
    bp = _pad2(bias.reshape(1, -1), 1, d_out_p, fill=-1e30, dtype=jnp.float32)

    vmem_limit = int(min(vmem_cap, max(2 * footprint(tb), 4 << 20)))

    out_p = pl.pallas_call(
        mlp_softmax_kernel,
        out_shape=jax.ShapeDtypeStruct((b_p, d_out_p), jnp.float32),
        grid=grid,
        in_specs=[
            pl.BlockSpec((tb, d_in_p), lambda i: (i, 0)),          # streamed x tiles
            _resident_spec((d_in_p, d_out_p), lambda i: (0, 0)),   # resident weight
            _resident_spec((1, d_out_p), lambda i: (0, 0)),        # resident bias
        ],
        out_specs=pl.BlockSpec((tb, d_out_p), lambda i: (i, 0)),
        compiler_params=pltpu.CompilerParams(
            dimension_semantics=("parallel",),
            vmem_limit_bytes=vmem_limit,
        ),
        cost_estimate=pl.CostEstimate(
            flops=2 * b_p * d_in_p * d_out_p,
            transcendentals=b_p * d_out_p,
            bytes_accessed=(b_p * d_in_p * in_itemsize
                            + d_in_p * d_out_p * in_itemsize
                            + b_p * d_out_p * 4),
        ),
    )(xp, wp, bp)
    return out_p, b_p


def _run_ktiled(x, weight, bias, B, D_in, D_out, d_in_p, d_out_p,
                compute_dtype, in_itemsize, vmem_cap, min_grid_steps, tk_override):
    # K tile: largest multiple of 128 whose double-buffered weight slab stays under
    # ~30% of the VMEM budget (or an explicit override for testing).
    if tk_override is not None:
        tk = min(max(LANE, _round_up(tk_override, LANE)), _round_up(d_in_p, LANE))
    else:
        tk = LANE
        while (tk + LANE <= d_in_p
               and 2 * (tk + LANE) * d_out_p * in_itemsize <= int(0.3 * vmem_cap)):
            tk += LANE
    d_in_p = _round_up(d_in_p, tk)
    kt = d_in_p // tk

    tb_target = max(SUB, min(1024, (2 << 20) // max(1, tk * in_itemsize)))
    tb = min(_round_up(tb_target, SUB), _round_up(B, SUB))
    if min_grid_steps > 1 and B > SUB:
        tb = min(tb, _round_up(pl.cdiv(B, min_grid_steps), SUB))

    def footprint(t):
        return (2 * t * tk * in_itemsize            # double-buffered streamed x tiles
                + 2 * t * d_out_p * 4               # double-buffered f32 output tiles
                + 2 * tk * d_out_p * in_itemsize    # double-buffered streamed weight
                + d_out_p * 4                       # resident bias
                + t * d_out_p * 4                   # f32 accumulator scratch
                + 2 * t * d_out_p * 4)              # exp/softmax f32 temporaries

    while tb > SUB and footprint(tb) > vmem_cap:
        tb -= SUB
    b_p = _round_up(B, tb)
    grid = (b_p // tb, kt)

    xp = _pad2(x, b_p, d_in_p, dtype=compute_dtype)
    wp = _pad2(weight, d_in_p, d_out_p, dtype=compute_dtype)
    bp = _pad2(bias.reshape(1, -1), 1, d_out_p, fill=-1e30, dtype=jnp.float32)

    vmem_limit = int(min(vmem_cap, max(2 * footprint(tb), 4 << 20)))

    out_p = pl.pallas_call(
        mlp_softmax_ktiled_kernel,
        out_shape=jax.ShapeDtypeStruct((b_p, d_out_p), jnp.float32),
        grid=grid,
        in_specs=[
            pl.BlockSpec((tb, tk), lambda i, k: (i, k)),            # streamed x tiles
            pl.BlockSpec((tk, d_out_p), lambda i, k: (k, 0)),       # streamed weight tiles
            _resident_spec((1, d_out_p), lambda i, k: (0, 0)),      # resident bias
        ],
        out_specs=pl.BlockSpec((tb, d_out_p), lambda i, k: (i, 0)),
        scratch_shapes=[pltpu.VMEM((tb, d_out_p), jnp.float32)],
        compiler_params=pltpu.CompilerParams(
            dimension_semantics=("parallel", "arbitrary"),
            vmem_limit_bytes=vmem_limit,
        ),
        cost_estimate=pl.CostEstimate(
            flops=2 * b_p * d_in_p * d_out_p,
            transcendentals=b_p * d_out_p,
            bytes_accessed=(b_p * d_in_p * in_itemsize
                            + d_in_p * d_out_p * in_itemsize
                            + b_p * d_out_p * 4),
        ),
    )(xp, wp, bp)
    return out_p, b_p


@functools.partial(
    jax.jit,
    static_argnames=("compute_dtype", "force_path", "min_grid_steps", "tk_override"),
)
def one_layer_mlp(x, weight, bias, *, compute_dtype=None, force_path=None,
                  min_grid_steps=2, tk_override=None):
    """softmax(x @ weight + bias, axis=1).  x:[B,D_in], weight:[D_in,D_out], bias:[D_out].

    compute_dtype=jnp.bfloat16 enables the fast MXU path (f32 accumulation kept);
    default keeps f32 operands for 1e-5 tolerance."""
    B, D_in = x.shape
    assert weight.shape[0] == D_in
    D_out = weight.shape[1]

    compute_dtype = np.dtype(compute_dtype if compute_dtype is not None else x.dtype)
    in_itemsize = compute_dtype.itemsize

    d_in_p = _round_up(D_in, LANE)
    d_out_p = _round_up(D_out, LANE)
    vmem_cap = _vmem_cap_bytes()

    weight_resident_bytes = d_in_p * d_out_p * in_itemsize
    use_ktiled = (force_path == "ktiled") or (
        force_path != "resident" and weight_resident_bytes > int(0.4 * vmem_cap))

    if use_ktiled:
        out_p, b_p = _run_ktiled(x, weight, bias, B, D_in, D_out, d_in_p, d_out_p,
                                 compute_dtype, in_itemsize, vmem_cap,
                                 min_grid_steps, tk_override)
    else:
        out_p, b_p = _run_resident(x, weight, bias, B, D_in, D_out, d_in_p, d_out_p,
                                   compute_dtype, in_itemsize, vmem_cap,
                                   min_grid_steps)

    # TODO(synk): if D_out ever grows past what fits as a single resident output tile,
    # add an N-tiled grid axis with an online (running max/sum) softmax.
    if b_p == B and d_out_p == D_out:
        return out_p
    return out_p[:B, :D_out]


if __name__ == "__main__":
    input_dim, output_dim, batch_size = 5, 3, 10

    key = jax.random.PRNGKey(0)
    kx, kw, kb = jax.random.split(key, 3)

    # Deterministic synthetic parameters (nn.Linear's uniform(-1/sqrt(fan_in), ...) range).
    bound = 1.0 / (input_dim ** 0.5)
    x = jax.random.normal(kx, (batch_size, input_dim), dtype=jnp.float32)
    weight = jax.random.uniform(kw, (input_dim, output_dim),
                                minval=-bound, maxval=bound, dtype=jnp.float32)
    bias = jax.random.uniform(kb, (output_dim,),
                              minval=-bound, maxval=bound, dtype=jnp.float32)

    y = one_layer_mlp(x, weight, bias)
    jax.block_until_ready(y)

    ref = jax.nn.softmax(x @ weight + bias, axis=1)
    assert y.shape == (batch_size, output_dim)
    assert jnp.allclose(y, ref, atol=1e-5, rtol=1e-5)

    # Also validate the K-tiled fallback (used when the weight can't stay resident in VMEM),
    # forcing multiple reduction steps via a small K tile.
    kx2, kw2, kb2 = jax.random.split(jax.random.PRNGKey(1), 3)
    d_in2, d_out2, b2 = 300, 130, 24
    x2 = jax.random.normal(kx2, (b2, d_in2), dtype=jnp.float32)
    w2 = jax.random.normal(kw2, (d_in2, d_out2), dtype=jnp.float32) * 0.05
    bias2 = jax.random.normal(kb2, (d_out2,), dtype=jnp.float32) * 0.05
    y2 = one_layer_mlp(x2, w2, bias2, force_path="ktiled", tk_override=128)
    jax.block_until_ready(y2)
    ref2 = jax.nn.softmax(x2 @ w2 + bias2, axis=1)
    assert y2.shape == (b2, d_out2)
    assert jnp.allclose(y2, ref2, atol=1e-5, rtol=1e-5)

    print("KERNEL_OK")
</pallas_src>

<mosaic_0001>
module attributes {stable_mosaic.version = 11 : i64} {
  func.func @mlp_softmax_kernel(%arg0: i32, %arg1: memref<8x128xf32, #tpu.memory_space<vmem>>, %arg2: memref<128x128xf32, #tpu.memory_space<vmem>>, %arg3: memref<1x128xf32, #tpu.memory_space<vmem>>, %arg4: memref<8x128xf32, #tpu.memory_space<vmem>>) attributes {dimension_semantics = [#tpu.dimension_semantics<parallel>], iteration_bounds = array<i64: 2>, scalar_prefetch = 0 : i64, scratch_operands = 0 : i64, tpu.core_type = #tpu.core_type<tc>, window_params = [{transform_indices = @transform_0, window_bounds = array<i64: 8, 128>}, {pipeline_mode = #tpu.pipeline_mode<synchronous>, transform_indices = @transform_1, window_bounds = array<i64: 128, 128>}, {pipeline_mode = #tpu.pipeline_mode<synchronous>, transform_indices = @transform_2, window_bounds = array<i64: 1, 128>}, {transform_indices = @transform_3, window_bounds = array<i64: 8, 128>}]} {
    %c0 = arith.constant 0 : index
    %c0_0 = arith.constant 0 : index
    %0 = vector.load %arg1[%c0, %c0_0] : memref<8x128xf32, #tpu.memory_space<vmem>>, vector<8x128xf32>
    %c0_1 = arith.constant 0 : index
    %c0_2 = arith.constant 0 : index
    %1 = vector.load %arg2[%c0_1, %c0_2] : memref<128x128xf32, #tpu.memory_space<vmem>>, vector<128x128xf32>
    %cst = arith.constant dense<0.000000e+00> : vector<8x128xf32>
    %2 = tpu.matmul %0, %1, %cst {dimension_numbers = #tpu.dot_dimension_numbers<[1], [0], [0], [1], [0, 0, 1, 1], [], []>} : vector<8x128xf32>, vector<128x128xf32>, vector<8x128xf32> -> vector<8x128xf32>
    %c0_3 = arith.constant 0 : index
    %c0_4 = arith.constant 0 : index
    %3 = vector.load %arg3[%c0_3, %c0_4] : memref<1x128xf32, #tpu.memory_space<vmem>>, vector<1x128xf32>
    %4 = vector.broadcast %3 : vector<1x128xf32> to vector<8x128xf32>
    %5 = arith.addf %2, %4 : vector<8x128xf32>
    %c0_5 = arith.constant 0 : index
    %c0_6 = arith.constant 0 : index
    %6 = vector.load %arg4[%c0_5, %c0_6] : memref<8x128xf32, #tpu.memory_space<vmem>>, vector<8x128xf32>
    tpu.vector_store %arg4[%c0_5, %c0_6], %5 {strides = array<i32>} : memref<8x128xf32, #tpu.memory_space<vmem>>, vector<8x128xf32>,
    %c0_7 = arith.constant 0 : index
    %c0_8 = arith.constant 0 : index
    %7 = vector.load %arg4[%c0_7, %c0_8] : memref<8x128xf32, #tpu.memory_space<vmem>>, vector<8x128xf32>
    %cst_9 = arith.constant dense<0xFF800000> : vector<8xf32>
    %8 = vector.multi_reduction <maximumf>, %7, %cst_9 [1] : vector<8x128xf32> to vector<8xf32>
    %9 = vector.shape_cast %8 : vector<8xf32> to vector<8x1xf32>
    %10 = vector.broadcast %9 : vector<8x1xf32> to vector<8x128xf32>
    %11 = arith.subf %7, %10 : vector<8x128xf32>
    %12 = math.exp %11 : vector<8x128xf32>
    %cst_10 = arith.constant dense<0.000000e+00> : vector<8xf32>
    %13 = vector.multi_reduction <add>, %12, %cst_10 [1] : vector<8x128xf32> to vector<8xf32>
    %14 = vector.shape_cast %13 : vector<8xf32> to vector<8x1xf32>
    %15 = tpu.reciprocal %14 : vector<8x1xf32> -> vector<8x1xf32>
    %16 = vector.broadcast %15 : vector<8x1xf32> to vector<8x128xf32>
    %17 = arith.mulf %12, %16 : vector<8x128xf32>
    %c0_11 = arith.constant 0 : index
    %c0_12 = arith.constant 0 : index
    %18 = vector.load %arg4[%c0_11, %c0_12] : memref<8x128xf32, #tpu.memory_space<vmem>>, vector<8x128xf32>
    tpu.vector_store %arg4[%c0_11, %c0_12], %17 {strides = array<i32>} : memref<8x128xf32, #tpu.memory_space<vmem>>, vector<8x128xf32>,
    return
  }
  func.func @transform_0(%arg0: i32) -> (i32, i32) {
    %c0_i32 = arith.constant 0 : i32
    %c0_i32_0 = arith.constant 0 : i32
    return %arg0, %c0_i32 : i32, i32
  }
  func.func @transform_1(%arg0: i32) -> (i32, i32) {
    %c0_i32 = arith.constant 0 : i32
    %c0_i32_0 = arith.constant 0 : i32
    %c0_i32_1 = arith.constant 0 : i32
    return %c0_i32, %c0_i32_0 : i32, i32
  }
  func.func @transform_2(%arg0: i32) -> (i32, i32) {
    %c0_i32 = arith.constant 0 : i32
    %c0_i32_0 = arith.constant 0 : i32
    %c0_i32_1 = arith.constant 0 : i32
    return %c0_i32, %c0_i32_0 : i32, i32
  }
  func.func @transform_3(%arg0: i32) -> (i32, i32) {
    %c0_i32 = arith.constant 0 : i32
    %c0_i32_0 = arith.constant 0 : i32
    return %arg0, %c0_i32 : i32, i32
  }
}

</mosaic_0001>

<llo_original>
// kernel: one_layer_mlp.1
$region0: #{one_layer_mlp.1}
  #allocation0 [shape = 'u32[]', space=smem, size = 0x4, offset = 0x4, fixed_abs, tag = 'smem constant byte address 0x4 - core index']
  #allocation1 [shape = 'u32[72,128]{1,0:T(1,128)}', space=vmem, size = 0x9000, scoped, tag = 'internal scratch']
  %s0 = inlined_call_operand.vmem [shape: f32[16,128], index: 0, kind: input, shape index: {}]
  %s1 = inlined_call_operand.vmem [shape: f32[128,128], index: 1, kind: input, shape index: {}]
  %s2 = inlined_call_operand.vmem [shape: f32[1,128], index: 2, kind: input, shape index: {}]
  %s3 = inlined_call_operand.vmem [shape: f32[16,128], index: 3, kind: output, shape index: {}]
  %s4 = sld [smem:[#allocation0]]
  $region45: #{one_layer_mlp.1} parent=0
    _
  %s6 = ssub.s32 1, %s4
  %s7 = scalar_select 0, %s6, %s4
  loop: start=0, step=1, limit=4
  $region2: #{one_layer_mlp.1} parent=0 // loop_pre_header
    _
  $region3: #{one_layer_mlp.1} parent=0 // loop_header
    %s9 = sphi 0, %s13
    %p10 = scmp.ge.s32.totalorder %s9, 4
    %s19 = sphi 0, %s21
    %s22 = sphi 0, %s19
    %s23 = sphi 0, %s22
    %s39 = sphi 0, %s23
    %s43 = sphi 0, %s43
    %s45 = sphi 0, %s43
    %s46 = sphi 0, %s45
    %s60 = sphi 0, %s46
    %s64 = sphi 0, %s64
    %s66 = sphi 0, %s64
    %s67 = sphi 0, %s66
    %s81 = sphi 0, %s67
    %s87 = sphi 0, %s89
    %s90 = sphi 0, %s87
    %s91 = sphi 0, %s90
    %s107 = sphi 0, %s91
  $region4: #{one_layer_mlp.1} parent=0 // loop_header_branch
    %12 = sbr.rel (%p10) target = $region8
  $region5: #{one_layer_mlp.1} parent=0 // loop_body
    %s14 = ssub.s32 %s9, 1
    %s15 = ssub.s32 %s9, 2
    %s16 = sadd.s32 %s9, 1
    %s17 = ssub.s32 %s9, %s16
    %p18 = scmp.eq.s32.totalorder %s17, 0
    %s20 = sadd.s32 %s19, 1
    %s21 = scalar_select %p18, %s19, %s20
    %p24 = pneg %p18
    %p25 = scmp.eq.s32.totalorder %s9, 1
    %p26 = por %p24, %p25
    %p27 = scmp.ne.s32.totalorder %s19, %s22
    %p28 = scmp.eq.s32.totalorder %s9, 0
    %p29 = por %p27, %p28
    %p30 = scmp.ne.s32.totalorder %s19, %s22
    %p31 = scmp.eq.s32.totalorder %s14, 1
    %p32 = por %p30, %p31
    %p33 = scmp.ne.s32.totalorder %s22, %s23
    %p34 = scmp.eq.s32.totalorder %s14, 0
    %p35 = por %p33, %p34
    %p36 = scmp.ne.s32.totalorder %s22, %s23
    %p37 = scmp.eq.s32.totalorder %s15, 1
    %p38 = por %p36, %p37
    %p40 = scmp.ne.s32.totalorder %s23, %s39
    %p41 = scmp.eq.s32.totalorder %s15, 0
    %p42 = por %p40, %p41
    %s44 = sadd.s32 %s43, 1
    %p47 = scmp.eq.s32.totalorder %s9, 1
    %p48 = scmp.ne.s32.totalorder %s43, %s45
    %p49 = scmp.eq.s32.totalorder %s9, 0
    %p50 = por %p48, %p49
    %p51 = scmp.ne.s32.totalorder %s43, %s45
    %p52 = scmp.eq.s32.totalorder %s14, 1
    %p53 = por %p51, %p52
    %p54 = scmp.ne.s32.totalorder %s45, %s46
    %p55 = scmp.eq.s32.totalorder %s14, 0
    %p56 = por %p54, %p55
    %p57 = scmp.ne.s32.totalorder %s45, %s46
    %p58 = scmp.eq.s32.totalorder %s15, 1
    %p59 = por %p57, %p58
    %p61 = scmp.ne.s32.totalorder %s46, %s60
    %p62 = scmp.eq.s32.totalorder %s15, 0
    %p63 = por %p61, %p62
    %s65 = sadd.s32 %s64, 1
    %p68 = scmp.eq.s32.totalorder %s9, 1
    %p69 = scmp.ne.s32.totalorder %s64, %s66
    %p70 = scmp.eq.s32.totalorder %s9, 0
    %p71 = por %p69, %p70
    %p72 = scmp.ne.s32.totalorder %s64, %s66
    %p73 = scmp.eq.s32.totalorder %s14, 1
    %p74 = por %p72, %p73
    %p75 = scmp.ne.s32.totalorder %s66, %s67
    %p76 = scmp.eq.s32.totalorder %s14, 0
    %p77 = por %p75, %p76
    %p78 = scmp.ne.s32.totalorder %s66, %s67
    %p79 = scmp.eq.s32.totalorder %s15, 1
    %p80 = por %p78, %p79
    %p82 = scmp.ne.s32.totalorder %s67, %s81
    %p83 = scmp.eq.s32.totalorder %s15, 0
    %p84 = por %p82, %p83
    %s85 = ssub.s32 %s9, %s16
    %p86 = scmp.eq.s32.totalorder %s85, 0
    %s88 = sadd.s32 %s87, 1
    %s89 = scalar_select %p86, %s87, %s88
    %p92 = pneg %p86
    %p93 = scmp.eq.s32.totalorder %s9, 1
    %p94 = por %p92, %p93
    %p95 = scmp.ne.s32.totalorder %s87, %s90
    %p96 = scmp.eq.s32.totalorder %s9, 0
    %p97 = por %p95, %p96
    %p98 = scmp.ne.s32.totalorder %s87, %s90
    %p99 = scmp.eq.s32.totalorder %s14, 1
    %p100 = por %p98, %p99
    %p101 = scmp.ne.s32.totalorder %s90, %s91
    %p102 = scmp.eq.s32.totalorder %s14, 0
    %p103 = por %p101, %p102
    %p104 = scmp.ne.s32.totalorder %s90, %s91
    %p105 = scmp.eq.s32.totalorder %s15, 1
    %p106 = por %p104, %p105
    %p108 = scmp.ne.s32.totalorder %s91, %s107
    %p109 = scmp.eq.s32.totalorder %s15, 0
    %p110 = por %p108, %p109
    %p111 = scmp.le.s32.totalorder 1, %s9
    %p112 = scmp.lt.s32.totalorder %s9, 3
    %p113 = pnand %p111, %p112
    %p114 = pneg %p113
    // Predicated region
    $region9: #{one_layer_mlp.1} parent=5 // pred_check
      _
    $region10: #{one_layer_mlp.1} parent=5 // pred_check_branch
      %116 = sbr.rel (%p113) target = $region12
    $region11: #{one_layer_mlp.1} parent=5 // pred_region
      %s117 = ssub.s32 %s9, 1
      // Predicated region
      $region13: #{one_layer_mlp.1} parent=11 // pred_check
        %p118 = pneg %p56
      $region14: #{one_layer_mlp.1} parent=11 // pred_check_branch
        %120 = sbr.rel (%p118) target = $region16
      $region15: #{one_layer_mlp.1} parent=11 // pred_region
        _
      $region16: #{one_layer_mlp.1} parent=11 // pred_fallthru
        _
      // Predicated region
      $region17: #{one_layer_mlp.1} parent=11 // pred_check
        %p121 = pneg %p77
      $region18: #{one_layer_mlp.1} parent=11 // pred_check_branch
        %123 = sbr.rel (%p121) target = $region20
      $region19: #{one_layer_mlp.1} parent=11 // pred_region
        _
      $region20: #{one_layer_mlp.1} parent=11 // pred_fallthru
        _
    $region12: #{one_layer_mlp.1} parent=5 // pred_fallthru
      _
    %p124 = scmp.lt.s32.totalorder %s9, 2
    // Predicated region
    $region21: #{one_layer_mlp.1} parent=5 // pred_check
      %p125 = pneg %p124
    $region22: #{one_layer_mlp.1} parent=5 // pred_check_branch
      %127 = sbr.rel (%p125) target = $region24
    $region23: #{one_layer_mlp.1} parent=5 // pred_region
      // Predicated region
      $region25: #{one_layer_mlp.1} parent=23 // pred_check
        %p128 = pneg %p29
      $region26: #{one_layer_mlp.1} parent=23 // pred_check_branch
        %130 = sbr.rel (%p128) target = $region28
      $region27: #{one_layer_mlp.1} parent=23 // pred_region
        %p131 = scmp.lt.s32.totalorder %s9, 1
        %s132 = scalar_select %p131, %s9, 1
        %s133 = smul.addr %s132, 8
        %s134 = scalar_lea.vmem %s0, %s133
      $region28: #{one_layer_mlp.1} parent=23 // pred_fallthru
        _
    $region24: #{one_layer_mlp.1} parent=5 // pred_fallthru
      _
    %p135 = scmp.le.s32.totalorder 1, %s9
    %p136 = scmp.lt.s32.totalorder %s9, 3
    %p137 = pnand %p135, %p136
    %p138 = pneg %p137
    // Predicated region
    $region29: #{one_layer_mlp.1} parent=5 // pred_check
      _
    $region30: #{one_layer_mlp.1} parent=5 // pred_check_branch
      %140 = sbr.rel (%p137) target = $region32
    $region31: #{one_layer_mlp.1} parent=5 // pred_region
      %s141 = ssub.s32 %s9, 1
      %p142 = scmp.lt.s32.totalorder %s14, 1
      %s143 = scalar_select %p142, %s14, 1
      %s144 = smul.addr %s143, 8
      %s145 = scalar_lea.vmem %s0, %s144
      %p146 = pneg %p35
      %p147 = pneg %p32
      %p148 = pneg %p56
      %p149 = pneg %p53
      %p150 = pneg %p77
      %p151 = pneg %p74
      %p152 = pneg %p103
      %p153 = pneg %p100
      %p154 = scmp.lt.s32.totalorder %s14, 1
      %s155 = scalar_select %p154, %s14, 1
      %s156 = smul.addr %s155, 8
      %s157 = scalar_lea.vmem %s3, %s156
      %p158 = scmp.lt.s32.totalorder %s14, 1
      %s159 = scalar_select %p158, %s14, 1
      %s160 = smul.addr %s159, 8
      %s161 = scalar_lea.vmem %s0, %s160
      %p162 = scmp.lt.s32.totalorder %s14, 1
      %s163 = scalar_select %p162, %s14, 1
      %s164 = smul.addr %s163, 8
      %s165 = scalar_lea.vmem %s3, %s164
      %v166 = vld [vmem:[%s161] sm:$0xff]
      %v167 = vld [vmem:[%s1] sm:$0xff]
      %v168 = vld [vmem:[%s1 + $0x8] sm:$0xff]
      %v169 = vld [vmem:[%s1 + $0x10] sm:$0xff]
      %v170 = vld [vmem:[%s1 + $0x18] sm:$0xff]
      %v171 = vld [vmem:[%s1 + $0x20] sm:$0xff]
      %v172 = vld [vmem:[%s1 + $0x28] sm:$0xff]
      %v173 = vld [vmem:[%s1 + $0x30] sm:$0xff]
      %v174 = vld [vmem:[%s1 + $0x38] sm:$0xff]
      %v175 = vld [vmem:[%s1 + $0x40] sm:$0xff]
      %v176 = vld [vmem:[%s1 + $0x48] sm:$0xff]
      %v177 = vld [vmem:[%s1 + $0x50] sm:$0xff]
      %v178 = vld [vmem:[%s1 + $0x58] sm:$0xff]
      %v179 = vld [vmem:[%s1 + $0x60] sm:$0xff]
      %v180 = vld [vmem:[%s1 + $0x68] sm:$0xff]
      %v181 = vld [vmem:[%s1 + $0x70] sm:$0xff]
      %v182 = vld [vmem:[%s1 + $0x78] sm:$0xff]
      %v183 = vld [vmem:[%s2] sm:$0x1]
      %v185 = vperm.slane %v183, 0
      %187 = vmatpush.msra.mxu0 %v182
      %188 = vmatpush.msra.mxu0 %v181
      %189 = vmatpush.msra.mxu0 %v180
      %190 = vmatpush.msra.mxu0 %v179
      %191 = vmatpush.msra.mxu0 %v178
      %192 = vmatpush.msra.mxu0 %v177
      %193 = vmatpush.msra.mxu0 %v176
      %194 = vmatpush.msra.mxu0 %v175
      %195 = vmatpush.msra.mxu0 %v174
      %196 = vmatpush.msra.mxu0 %v173
      %197 = vmatpush.msra.mxu0 %v172
      %198 = vmatpush.msra.mxu0 %v171
      %199 = vmatpush.msra.mxu0 %v170
      %200 = vmatpush.msra.mxu0 %v169
      %201 = vmatpush.msra.mxu0 %v168
      %202 = vmatpush.msra.mxu0 %v167
      %203 = vmatmul.f32.gmra.mxu0 %v166
      %v204 = vpop.f32.mrf.mxu0
      %v205 = vadd.f32 %v185, %v204
      %206 = vdwg.mxu0
      %207 = vst [vmem:[%s165] sm:$0xff] %v205
      %v208 = vld [vmem:[%s165] sm:$0xff]
      %209 = vmax.xlane.f32.xlu0 %v208
      %v210 = vpop.xlane.xlu0 %209
      %v211 = vsub.f32 %v208, %v210
      %v212 = vmul.f32 %v211, 1.442695
      %v213 = vpow.pop %v212
      %214 = vadd.xlane.f32.xlu0 %v213
      %v215 = vpop.xlane.xlu0 %214
      %v216 = vrcp.pop %v215
      %v217 = vmul.f32 %v215, %v216
      %v218 = vsub.f32 1.0, %v217
      %v219 = vmul.f32 %v216, %v218
      %v220 = vadd.f32 %v216, %v219
      %vm221 = vweird.f32 %v215
      %vm222 = vweird.f32 %v216
      %vm223 = vmor %vm221, %vm222
      %v224 = vsel %vm223, %v216, %v220
      %v225 = vand.u32 2147483647, %v215
      %vm226 = vcmp.eq.f32.partialorder %v225, 8.507059e+37
      %v227 = vand.u32 %v215, 2147483648
      %v228 = vor.u32 1.1754944e-38, %v227
      %v229 = vsel %vm226, %v228, %v224
      %v230 = vmul.f32 %v213, %v229
      %231 = vst [vmem:[%s165] sm:$0xff] %v230
      %p232 = scmp.lt.s32.totalorder %s14, 1
      %s233 = scalar_select %p232, %s14, 1
      %s234 = smul.addr %s233, 8
      %s235 = scalar_lea.vmem %s3, %s234
      // Predicated region
      $region33: #{one_layer_mlp.1} parent=31 // pred_check
        %p236 = pneg %p100
      $region34: #{one_layer_mlp.1} parent=31 // pred_check_branch
        %238 = sbr.rel (%p236) target = $region36
      $region35: #{one_layer_mlp.1} parent=31 // pred_region
        _
      $region36: #{one_layer_mlp.1} parent=31 // pred_fallthru
        _
    $region32: #{one_layer_mlp.1} parent=5 // pred_fallthru
      _
    %p239 = scmp.le.s32.totalorder 2, %s9
    // Predicated region
    $region37: #{one_layer_mlp.1} parent=5 // pred_check
      %p240 = pneg %p239
    $region38: #{one_layer_mlp.1} parent=5 // pred_check_branch
      %242 = sbr.rel (%p240) target = $region40
    $region39: #{one_layer_mlp.1} parent=5 // pred_region
      %s243 = ssub.s32 %s9, 2
      // Predicated region
      $region41: #{one_layer_mlp.1} parent=39 // pred_check
        %p244 = pneg %p106
      $region42: #{one_layer_mlp.1} parent=39 // pred_check_branch
        %246 = sbr.rel (%p244) target = $region44
      $region43: #{one_layer_mlp.1} parent=39 // pred_region
        %p247 = scmp.lt.s32.totalorder %s15, 1
        %s248 = scalar_select %p247, %s15, 1
        %s249 = smul.addr %s248, 8
        %s250 = scalar_lea.vmem %s3, %s249
      $region44: #{one_layer_mlp.1} parent=39 // pred_fallthru
        _
    $region40: #{one_layer_mlp.1} parent=5 // pred_fallthru
      _
  $region6: #{one_layer_mlp.1} parent=0 // loop_footer
    %s13 = sadd.s32 1, %s9
  $region7: #{one_layer_mlp.1} parent=0 // loop_footer_branch
    %8 = sbr.rel target = $region3
  $region8: #{one_layer_mlp.1} parent=0 // loop_exit
    _

</llo_original>
